<compile_context>
chip_gen: v7x
topology: tpu7x:2x2x1
jax: 0.10.0
libtpu: 0.0.40
codegen_flags: <defaults>
</compile_context>

<pallas_src>
import functools

import jax
import jax.numpy as jnp
from jax import lax
from jax.experimental import pallas as pl
from jax.experimental.pallas import tpu as pltpu

BN_EPS = 1e-5
LEAKY_SLOPE = 0.1
LANE = 128


def _round_up(x, m):
    return (x + m - 1) // m * m


def _vmem_sizes():
    """Generation-aware VMEM sizing (v7x: 64 MiB/TC, v5e/v6e: 128 MiB)."""
    cap = 64 * 1024 * 1024  # conservative (v7x-sized) fallback
    try:
        cap = int(pltpu.get_tpu_info().vmem_capacity_bytes)
    except Exception:
        pass
    tile_budget = (cap * 7) // 16     # ~28 MiB on v7x, ~56 MiB on v5e/v6e
    vmem_limit = (cap * 3) // 4       # ~48 MiB on v7x, ~96 MiB on v5e/v6e
    return tile_budget, vmem_limit


def _pick_row_tile(m_total, bytes_per_row, budget, min_steps=4):
    """Largest row tile (multiple of 8 sublanes) fitting the VMEM budget while
    keeping >= min_steps grid steps when possible: v7x has 2 TensorCores, and
    with dimension_semantics=('parallel',) each core needs >= 2 steps for the
    BlockSpec double-buffer pipeline to overlap DMA with compute."""
    cap = max(8, (budget // max(bytes_per_row, 1)) // 8 * 8)
    by_steps = max(8, _round_up(-(-m_total // min_steps), 8))
    return max(8, min(cap, by_steps))


# --------------------- pass 1: conv (one dot) + partial BN stats --------------------- #
def conv_stats_kernel(p_ref, w_ref, sum_ref, sq_ref):
    """One MXU dot over the folded K = KH*KW*Cin contraction, plus per-tile
    per-channel partial statistics.  No conv activation is written to HBM.

    p_ref:   (Mt, K)       bf16 im2col rows for this tile
    w_ref:   (K, Coutp)    bf16 folded conv weights (Cout lane-padded, resident)
    sum_ref: (1, 1, Coutp) f32  per-tile per-channel sum
    sq_ref:  (1, 1, Coutp) f32  per-tile per-channel sum of squares
    """
    y = jnp.dot(p_ref[...], w_ref[...], preferred_element_type=jnp.float32)
    sum_ref[...] = jnp.sum(y, axis=0, keepdims=True).reshape(1, 1, y.shape[-1])
    sq_ref[...] = jnp.sum(y * y, axis=0, keepdims=True).reshape(1, 1, y.shape[-1])


# ----------------- pass 2: conv recompute + BN affine + LeakyReLU ----------------- #
def conv_bn_act_kernel(p_ref, w_ref, scale_ref, shift_ref, o_ref):
    """Recompute the conv for this row tile, apply the folded BatchNorm affine
    and LeakyReLU(0.1), and store only the real Cout channels (compact write).

    p_ref:     (Mt, K)    bf16
    w_ref:     (K, Coutp) bf16
    scale_ref: (1, Coutp) f32   gamma * rsqrt(var + eps)
    shift_ref: (1, Coutp) f32   beta - mean * scale
    o_ref:     (Mt, Cout) output tile (unpadded channels, requested dtype)
    """
    y = jnp.dot(p_ref[...], w_ref[...], preferred_element_type=jnp.float32)
    z = y * scale_ref[...] + shift_ref[...]          # keep BN math in f32 (v5e: no bf16 VPU)
    z = jnp.where(z > 0, z, LEAKY_SLOPE * z)
    cout = o_ref.shape[-1]
    o_ref[...] = z[:, :cout].astype(o_ref.dtype)


# ----------------------------------- wrapper ----------------------------------- #
@functools.partial(jax.jit, static_argnames=("padding",))
def cnn_block(x_nchw, w_oihw, gamma, beta, *, padding=1):
    """CNNBlock forward. x_nchw: (N, Cin, H, W). Returns (N, Cout, H, W)."""
    N, cin, H0, W0 = x_nchw.shape
    cout, _, KH, KW = w_oihw.shape

    H = H0 + 2 * padding - KH + 1
    W = W0 + 2 * padding - KW + 1
    K = KH * KW * cin
    coutp = _round_up(cout, LANE)
    m_total = N * H * W

    # ---- boundary glue (not the hot path): NHWC + halo pad + im2col ----
    # Tiny-Cin layout fix: NHWC blocks would put only Cin=4 useful elements on the
    # 128-lane axis; pre-folding the taps into an (M, KH*KW*Cin) im2col LHS keeps
    # the kernel's contraction and its loads lane-friendly.
    # TODO(synk): for large-Cin layers build the patch inside the kernel (or tile K)
    # instead of materializing the 9x LHS in HBM, and keep activations NHWC /
    # pre-padded across layers so the transpose+pad below disappears.
    x = jnp.transpose(x_nchw, (0, 2, 3, 1)).astype(jnp.float32)
    x = jnp.pad(x, ((0, 0), (padding, padding), (padding, padding), (0, 0)))
    taps = [x[:, kh:kh + H, kw:kw + W, :] for kh in range(KH) for kw in range(KW)]
    patch = jnp.concatenate(taps, axis=-1).reshape(m_total, K).astype(jnp.bfloat16)

    # Folded conv weights: OIHW -> (KH, KW, Cin, Cout) -> (K, Coutp), bf16 operands.
    w = jnp.transpose(w_oihw, (2, 3, 1, 0)).reshape(K, cout).astype(jnp.bfloat16)
    if coutp != cout:
        w = jnp.pad(w, ((0, 0), (0, coutp - cout)))
    gamma_p = jnp.pad(gamma.astype(jnp.float32), (0, coutp - cout))
    beta_p = jnp.pad(beta.astype(jnp.float32), (0, coutp - cout))

    # ---- tiling: rows of the im2col matrix, VMEM-budgeted per generation ----
    tile_budget, vmem_limit = _vmem_sizes()
    k_lanes = _round_up(K, LANE)
    cout_lanes = _round_up(cout, LANE)
    per_row = (2 * 2 * k_lanes            # double-buffered bf16 LHS block (lane-padded in VMEM)
               + 2 * 4 * coutp            # f32 dot result + activation temps
               + 2 * 4 * cout_lanes)      # double-buffered compact output block
    mt = _pick_row_tile(m_total, per_row, tile_budget)
    m_pad = _round_up(m_total, mt)
    n_tiles = m_pad // mt
    if m_pad != m_total:
        # Zero-padded rows contribute exactly 0 to both sum and sum-of-squares, so
        # the BN statistics (divided by the true m_total) are unaffected.
        patch = jnp.pad(patch, ((0, m_pad - m_total), (0, 0)))

    mxu_flops = 2 * m_pad * K * coutp
    lhs_bytes = m_pad * K * 2 + K * coutp * 2

    # ---- pass 1: conv + per-tile partial stats (tiny outputs only) ----
    part_sum, part_sq = pl.pallas_call(
        conv_stats_kernel,
        out_shape=(
            jax.ShapeDtypeStruct((n_tiles, 1, coutp), jnp.float32),
            jax.ShapeDtypeStruct((n_tiles, 1, coutp), jnp.float32),
        ),
        grid=(n_tiles,),
        in_specs=[
            pl.BlockSpec((mt, K), lambda i: (i, 0)),
            pl.BlockSpec((K, coutp), lambda i: (0, 0)),
        ],
        out_specs=(
            pl.BlockSpec((1, 1, coutp), lambda i: (i, 0, 0)),
            pl.BlockSpec((1, 1, coutp), lambda i: (i, 0, 0)),
        ),
        compiler_params=pltpu.CompilerParams(
            dimension_semantics=("parallel",),
            vmem_limit_bytes=vmem_limit,
        ),
        cost_estimate=pl.CostEstimate(
            flops=mxu_flops, transcendentals=0,
            bytes_accessed=lhs_bytes + 2 * n_tiles * coutp * 4),
    )(patch, w)

    # ---- tiny global reduction + BN fold (XLA, on (Coutp,) vectors) ----
    # TODO(synk): E[x^2]-E[x]^2 in f32 can cancel for large-mean activations;
    # switch to per-tile centered sums / Welford combine if that regime shows up.
    count = jnp.float32(m_total)
    total_sum = jnp.sum(part_sum, axis=(0, 1))
    total_sq = jnp.sum(part_sq, axis=(0, 1))
    mean = total_sum / count
    var = jnp.maximum(total_sq / count - mean * mean, 0.0)  # biased var (PyTorch training fwd)
    inv_std = lax.rsqrt(var + BN_EPS)
    scale = (gamma_p * inv_std).reshape(1, coutp)
    shift = (beta_p - mean * gamma_p * inv_std).reshape(1, coutp)

    # ---- pass 2: conv recompute + BN affine + LeakyReLU, compact Cout store ----
    out_flat = pl.pallas_call(
        conv_bn_act_kernel,
        out_shape=jax.ShapeDtypeStruct((m_pad, cout), x_nchw.dtype),
        grid=(n_tiles,),
        in_specs=[
            pl.BlockSpec((mt, K), lambda i: (i, 0)),
            pl.BlockSpec((K, coutp), lambda i: (0, 0)),
            pl.BlockSpec((1, coutp), lambda i: (0, 0)),
            pl.BlockSpec((1, coutp), lambda i: (0, 0)),
        ],
        out_specs=pl.BlockSpec((mt, cout), lambda i: (i, 0)),
        compiler_params=pltpu.CompilerParams(
            dimension_semantics=("parallel",),
            vmem_limit_bytes=vmem_limit,
        ),
        cost_estimate=pl.CostEstimate(
            flops=mxu_flops + 4 * m_pad * coutp, transcendentals=0,
            bytes_accessed=lhs_bytes + 2 * coutp * 4
                           + m_pad * cout * x_nchw.dtype.itemsize),
    )(patch, w, scale, shift)

    # Compact (unpadded) NHWC rows -> NCHW.  The slice/reshape are free; only the
    # final transpose touches HBM and it runs on the Cout-wide compact tensor.
    # TODO(synk): fold this transpose into the kernel (store (Cout, M) tiles) or
    # keep activations NHWC across layers to drop it entirely.
    out_nhwc = out_flat[:m_total].reshape(N, H, W, cout)
    return jnp.transpose(out_nhwc, (0, 3, 1, 2))


# ----------------------------- pure-JAX reference ----------------------------- #
def reference_cnn_block(x_nchw, w_oihw, gamma, beta, *, padding=1):
    """Matches PyTorch Conv2d(bias=False) + BatchNorm2d(training) + LeakyReLU(0.1)."""
    y = lax.conv_general_dilated(
        x_nchw, w_oihw,
        window_strides=(1, 1),
        padding=[(padding, padding), (padding, padding)],
        dimension_numbers=("NCHW", "OIHW", "NCHW"),
    )
    mean = jnp.mean(y, axis=(0, 2, 3), keepdims=True)
    var = jnp.mean((y - mean) ** 2, axis=(0, 2, 3), keepdims=True)
    y = (y - mean) * lax.rsqrt(var + BN_EPS)
    y = y * gamma.reshape(1, -1, 1, 1) + beta.reshape(1, -1, 1, 1)
    return jnp.where(y > 0, y, LEAKY_SLOPE * y)


if __name__ == "__main__":
    key = jax.random.PRNGKey(0)
    k_x, k_w, k_g, k_b = jax.random.split(key, 4)

    # Small shapes consistent with CNNBlock(4, 8, kernel_size=3, padding=1)
    N, CIN, H, W = 2, 4, 16, 16
    COUT, KH, KW = 8, 3, 3

    x = jax.random.normal(k_x, (N, CIN, H, W), dtype=jnp.float32)
    fan_in = CIN * KH * KW
    w = jax.random.normal(k_w, (COUT, CIN, KH, KW), dtype=jnp.float32) * (1.0 / fan_in) ** 0.5
    gamma = 1.0 + 0.1 * jax.random.normal(k_g, (COUT,), dtype=jnp.float32)
    beta = 0.1 * jax.random.normal(k_b, (COUT,), dtype=jnp.float32)

    out = cnn_block(x, w, gamma, beta, padding=1)
    out = jax.block_until_ready(out)

    ref = reference_cnn_block(x, w, gamma, beta, padding=1)
    assert out.shape == (N, COUT, H, W), out.shape
    # bf16 MXU operands (f32 accumulation) => ~1e-2-level deviation from the f32 reference.
    err = float(jnp.max(jnp.abs(out - ref)))
    assert jnp.allclose(out, ref, atol=5e-2, rtol=5e-2), err

    print("KERNEL_OK")
</pallas_src>

<mosaic_0001>
module attributes {stable_mosaic.version = 11 : i64} {
  func.func @conv_stats_kernel(%arg0: i32, %arg1: memref<128x36xbf16, #tpu.memory_space<vmem>>, %arg2: memref<36x128xbf16, #tpu.memory_space<vmem>>, %arg3: memref<1x1x128xf32, #tpu.memory_space<vmem>>, %arg4: memref<1x1x128xf32, #tpu.memory_space<vmem>>) attributes {dimension_semantics = [#tpu.dimension_semantics<parallel>], iteration_bounds = array<i64: 4>, scalar_prefetch = 0 : i64, scratch_operands = 0 : i64, tpu.core_type = #tpu.core_type<tc>, window_params = [{transform_indices = @transform_0, window_bounds = array<i64: 128, 36>}, {pipeline_mode = #tpu.pipeline_mode<synchronous>, transform_indices = @transform_1, window_bounds = array<i64: 36, 128>}, {transform_indices = @transform_2, window_bounds = array<i64: 1, 1, 128>}, {transform_indices = @transform_3, window_bounds = array<i64: 1, 1, 128>}]} {
    %c0 = arith.constant 0 : index
    %c0_0 = arith.constant 0 : index
    %0 = vector.load %arg1[%c0, %c0_0] : memref<128x36xbf16, #tpu.memory_space<vmem>>, vector<128x36xbf16>
    %c0_1 = arith.constant 0 : index
    %c0_2 = arith.constant 0 : index
    %1 = vector.load %arg2[%c0_1, %c0_2] : memref<36x128xbf16, #tpu.memory_space<vmem>>, vector<36x128xbf16>
    %cst = arith.constant dense<0.000000e+00> : vector<128x128xf32>
    %2 = tpu.matmul %0, %1, %cst {dimension_numbers = #tpu.dot_dimension_numbers<[1], [0], [0], [1], [0, 0, 1, 1], [], []>} : vector<128x36xbf16>, vector<36x128xbf16>, vector<128x128xf32> -> vector<128x128xf32>
    %cst_3 = arith.constant dense<0.000000e+00> : vector<128xf32>
    %3 = vector.multi_reduction <add>, %2, %cst_3 [0] : vector<128x128xf32> to vector<128xf32>
    %4 = vector.shape_cast %3 : vector<128xf32> to vector<1x128xf32>
    %5 = vector.shape_cast %4 : vector<1x128xf32> to vector<1x1x128xf32>
    %c0_4 = arith.constant 0 : index
    %c0_5 = arith.constant 0 : index
    %c0_6 = arith.constant 0 : index
    %6 = vector.load %arg3[%c0_4, %c0_5, %c0_6] : memref<1x1x128xf32, #tpu.memory_space<vmem>>, vector<1x1x128xf32>
    tpu.vector_store %arg3[%c0_4, %c0_5, %c0_6], %5 {strides = array<i32>} : memref<1x1x128xf32, #tpu.memory_space<vmem>>, vector<1x1x128xf32>,
    %7 = arith.mulf %2, %2 : vector<128x128xf32>
    %cst_7 = arith.constant dense<0.000000e+00> : vector<128xf32>
    %8 = vector.multi_reduction <add>, %7, %cst_7 [0] : vector<128x128xf32> to vector<128xf32>
    %9 = vector.shape_cast %8 : vector<128xf32> to vector<1x128xf32>
    %10 = vector.shape_cast %9 : vector<1x128xf32> to vector<1x1x128xf32>
    %c0_8 = arith.constant 0 : index
    %c0_9 = arith.constant 0 : index
    %c0_10 = arith.constant 0 : index
    %11 = vector.load %arg4[%c0_8, %c0_9, %c0_10] : memref<1x1x128xf32, #tpu.memory_space<vmem>>, vector<1x1x128xf32>
    tpu.vector_store %arg4[%c0_8, %c0_9, %c0_10], %10 {strides = array<i32>} : memref<1x1x128xf32, #tpu.memory_space<vmem>>, vector<1x1x128xf32>,
    return
  }
  func.func @transform_0(%arg0: i32) -> (i32, i32) {
    %c0_i32 = arith.constant 0 : i32
    %c0_i32_0 = arith.constant 0 : i32
    return %arg0, %c0_i32 : i32, i32
  }
  func.func @transform_1(%arg0: i32) -> (i32, i32) {
    %c0_i32 = arith.constant 0 : i32
    %c0_i32_0 = arith.constant 0 : i32
    %c0_i32_1 = arith.constant 0 : i32
    return %c0_i32, %c0_i32_0 : i32, i32
  }
  func.func @transform_2(%arg0: i32) -> (i32, i32, i32) {
    %c0_i32 = arith.constant 0 : i32
    %c0_i32_0 = arith.constant 0 : i32
    %c0_i32_1 = arith.constant 0 : i32
    return %arg0, %c0_i32, %c0_i32_0 : i32, i32, i32
  }
  func.func @transform_3(%arg0: i32) -> (i32, i32, i32) {
    %c0_i32 = arith.constant 0 : i32
    %c0_i32_0 = arith.constant 0 : i32
    %c0_i32_1 = arith.constant 0 : i32
    return %arg0, %c0_i32, %c0_i32_0 : i32, i32, i32
  }
}

module attributes {stable_mosaic.version = 11 : i64} {
  func.func @conv_bn_act_kernel(%arg0: i32, %arg1: memref<128x36xbf16, #tpu.memory_space<vmem>>, %arg2: memref<36x128xbf16, #tpu.memory_space<vmem>>, %arg3: memref<1x128xf32, #tpu.memory_space<vmem>>, %arg4: memref<1x128xf32, #tpu.memory_space<vmem>>, %arg5: memref<128x8xf32, #tpu.memory_space<vmem>>) attributes {dimension_semantics = [#tpu.dimension_semantics<parallel>], iteration_bounds = array<i64: 4>, scalar_prefetch = 0 : i64, scratch_operands = 0 : i64, tpu.core_type = #tpu.core_type<tc>, window_params = [{transform_indices = @transform_0, window_bounds = array<i64: 128, 36>}, {pipeline_mode = #tpu.pipeline_mode<synchronous>, transform_indices = @transform_1, window_bounds = array<i64: 36, 128>}, {pipeline_mode = #tpu.pipeline_mode<synchronous>, transform_indices = @transform_2, window_bounds = array<i64: 1, 128>}, {pipeline_mode = #tpu.pipeline_mode<synchronous>, transform_indices = @transform_3, window_bounds = array<i64: 1, 128>}, {transform_indices = @transform_4, window_bounds = array<i64: 128, 8>}]} {
    %c0 = arith.constant 0 : index
    %c0_0 = arith.constant 0 : index
    %0 = vector.load %arg1[%c0, %c0_0] : memref<128x36xbf16, #tpu.memory_space<vmem>>, vector<128x36xbf16>
    %c0_1 = arith.constant 0 : index
    %c0_2 = arith.constant 0 : index
    %1 = vector.load %arg2[%c0_1, %c0_2] : memref<36x128xbf16, #tpu.memory_space<vmem>>, vector<36x128xbf16>
    %cst = arith.constant dense<0.000000e+00> : vector<128x128xf32>
    %2 = tpu.matmul %0, %1, %cst {dimension_numbers = #tpu.dot_dimension_numbers<[1], [0], [0], [1], [0, 0, 1, 1], [], []>} : vector<128x36xbf16>, vector<36x128xbf16>, vector<128x128xf32> -> vector<128x128xf32>
    %c0_3 = arith.constant 0 : index
    %c0_4 = arith.constant 0 : index
    %3 = vector.load %arg3[%c0_3, %c0_4] : memref<1x128xf32, #tpu.memory_space<vmem>>, vector<1x128xf32>
    %4 = vector.broadcast %3 : vector<1x128xf32> to vector<128x128xf32>
    %5 = arith.mulf %2, %4 : vector<128x128xf32>
    %c0_5 = arith.constant 0 : index
    %c0_6 = arith.constant 0 : index
    %6 = vector.load %arg4[%c0_5, %c0_6] : memref<1x128xf32, #tpu.memory_space<vmem>>, vector<1x128xf32>
    %7 = vector.broadcast %6 : vector<1x128xf32> to vector<128x128xf32>
    %8 = arith.addf %5, %7 : vector<128x128xf32>
    %cst_7 = arith.constant 0.000000e+00 : f32
    %9 = vector.broadcast %cst_7 : f32 to vector<128x128xf32>
    %10 = arith.cmpf ogt, %8, %9 : vector<128x128xf32>
    %cst_8 = arith.constant 1.000000e-01 : f32
    %11 = vector.broadcast %cst_8 : f32 to vector<128x128xf32>
    %12 = arith.mulf %11, %8 : vector<128x128xf32>
    %13 = arith.select %10, %8, %12 : vector<128x128xi1>, vector<128x128xf32>
    %14 = vector.extract_strided_slice %13 {offsets = [0, 0], sizes = [128, 8], strides = [1, 1]} : vector<128x128xf32> to vector<128x8xf32>
    %c0_9 = arith.constant 0 : index
    %c0_10 = arith.constant 0 : index
    %15 = vector.load %arg5[%c0_9, %c0_10] : memref<128x8xf32, #tpu.memory_space<vmem>>, vector<128x8xf32>
    tpu.vector_store %arg5[%c0_9, %c0_10], %14 {strides = array<i32>} : memref<128x8xf32, #tpu.memory_space<vmem>>, vector<128x8xf32>,
    return
  }
  func.func @transform_0(%arg0: i32) -> (i32, i32) {
    %c0_i32 = arith.constant 0 : i32
    %c0_i32_0 = arith.constant 0 : i32
    return %arg0, %c0_i32 : i32, i32
  }
  func.func @transform_1(%arg0: i32) -> (i32, i32) {
    %c0_i32 = arith.constant 0 : i32
    %c0_i32_0 = arith.constant 0 : i32
    %c0_i32_1 = arith.constant 0 : i32
    return %c0_i32, %c0_i32_0 : i32, i32
  }
  func.func @transform_2(%arg0: i32) -> (i32, i32) {
    %c0_i32 = arith.constant 0 : i32
    %c0_i32_0 = arith.constant 0 : i32
    %c0_i32_1 = arith.constant 0 : i32
    return %c0_i32, %c0_i32_0 : i32, i32
  }
  func.func @transform_3(%arg0: i32) -> (i32, i32) {
    %c0_i32 = arith.constant 0 : i32
    %c0_i32_0 = arith.constant 0 : i32
    %c0_i32_1 = arith.constant 0 : i32
    return %c0_i32, %c0_i32_0 : i32, i32
  }
  func.func @transform_4(%arg0: i32) -> (i32, i32) {
    %c0_i32 = arith.constant 0 : i32
    %c0_i32_0 = arith.constant 0 : i32
    return %arg0, %c0_i32 : i32, i32
  }
}

</mosaic_0001>

<llo_original>
// kernel: cnn_block.2
$region0: #{cnn_block.2}
  #allocation0 [shape = 'u32[]', space=smem, size = 0x4, offset = 0x4, fixed_abs, tag = 'smem constant byte address 0x4 - core index']
  #allocation1 [shape = 'u32[144,128]{1,0:T(1,128)}', space=vmem, size = 0x12000, scoped, tag = 'internal scratch']
  %s0 = inlined_call_operand.vmem [shape: bf16[512,36], index: 0, kind: input, shape index: {}]
  %s1 = inlined_call_operand.vmem [shape: bf16[36,128], index: 1, kind: input, shape index: {}]
  %s2 = inlined_call_operand.vmem [shape: f32[4,1,128], index: 2, kind: output, shape index: {0}]
  %s3 = inlined_call_operand.vmem [shape: f32[4,1,128], index: 3, kind: output, shape index: {1}]
  %4 = xla_tuple %s2, %s3
  %s5 = sld [smem:[#allocation0]]
  $region49: #{cnn_block.2} parent=0
    _
  %s7 = ssub.s32 1, %s5
  %s8 = scalar_select 0, %s7, %s5
  loop: start=0, step=1, limit=6
  $region2: #{cnn_block.2} parent=0 // loop_pre_header
    _
  $region3: #{cnn_block.2} parent=0 // loop_header
    %s10 = sphi 0, %s14
    %p11 = scmp.ge.s32.totalorder %s10, 6
    %s20 = sphi 0, %s22
    %s23 = sphi 0, %s20
    %s24 = sphi 0, %s23
    %s40 = sphi 0, %s24
    %s44 = sphi 0, %s44
    %s46 = sphi 0, %s44
    %s47 = sphi 0, %s46
    %s61 = sphi 0, %s47
    %s67 = sphi 0, %s69
    %s70 = sphi 0, %s67
    %s71 = sphi 0, %s70
    %s87 = sphi 0, %s71
    %s93 = sphi 0, %s95
    %s96 = sphi 0, %s93
    %s97 = sphi 0, %s96
    %s113 = sphi 0, %s97
  $region4: #{cnn_block.2} parent=0 // loop_header_branch
    %13 = sbr.rel (%p11) target = $region8
  $region5: #{cnn_block.2} parent=0 // loop_body
    %s15 = ssub.s32 %s10, 1
    %s16 = ssub.s32 %s10, 2
    %s17 = sadd.s32 %s10, 1
    %s18 = ssub.s32 %s10, %s17
    %p19 = scmp.eq.s32.totalorder %s18, 0
    %s21 = sadd.s32 %s20, 1
    %s22 = scalar_select %p19, %s20, %s21
    %p25 = pneg %p19
    %p26 = scmp.eq.s32.totalorder %s10, 3
    %p27 = por %p25, %p26
    %p28 = scmp.ne.s32.totalorder %s20, %s23
    %p29 = scmp.eq.s32.totalorder %s10, 0
    %p30 = por %p28, %p29
    %p31 = scmp.ne.s32.totalorder %s20, %s23
    %p32 = scmp.eq.s32.totalorder %s15, 3
    %p33 = por %p31, %p32
    %p34 = scmp.ne.s32.totalorder %s23, %s24
    %p35 = scmp.eq.s32.totalorder %s15, 0
    %p36 = por %p34, %p35
    %p37 = scmp.ne.s32.totalorder %s23, %s24
    %p38 = scmp.eq.s32.totalorder %s16, 3
    %p39 = por %p37, %p38
    %p41 = scmp.ne.s32.totalorder %s24, %s40
    %p42 = scmp.eq.s32.totalorder %s16, 0
    %p43 = por %p41, %p42
    %s45 = sadd.s32 %s44, 1
    %p48 = scmp.eq.s32.totalorder %s10, 3
    %p49 = scmp.ne.s32.totalorder %s44, %s46
    %p50 = scmp.eq.s32.totalorder %s10, 0
    %p51 = por %p49, %p50
    %p52 = scmp.ne.s32.totalorder %s44, %s46
    %p53 = scmp.eq.s32.totalorder %s15, 3
    %p54 = por %p52, %p53
    %p55 = scmp.ne.s32.totalorder %s46, %s47
    %p56 = scmp.eq.s32.totalorder %s15, 0
    %p57 = por %p55, %p56
    %p58 = scmp.ne.s32.totalorder %s46, %s47
    %p59 = scmp.eq.s32.totalorder %s16, 3
    %p60 = por %p58, %p59
    %p62 = scmp.ne.s32.totalorder %s47, %s61
    %p63 = scmp.eq.s32.totalorder %s16, 0
    %p64 = por %p62, %p63
    %s65 = ssub.s32 %s10, %s17
    %p66 = scmp.eq.s32.totalorder %s65, 0
    %s68 = sadd.s32 %s67, 1
    %s69 = scalar_select %p66, %s67, %s68
    %p72 = pneg %p66
    %p73 = scmp.eq.s32.totalorder %s10, 3
    %p74 = por %p72, %p73
    %p75 = scmp.ne.s32.totalorder %s67, %s70
    %p76 = scmp.eq.s32.totalorder %s10, 0
    %p77 = por %p75, %p76
    %p78 = scmp.ne.s32.totalorder %s67, %s70
    %p79 = scmp.eq.s32.totalorder %s15, 3
    %p80 = por %p78, %p79
    %p81 = scmp.ne.s32.totalorder %s70, %s71
    %p82 = scmp.eq.s32.totalorder %s15, 0
    %p83 = por %p81, %p82
    %p84 = scmp.ne.s32.totalorder %s70, %s71
    %p85 = scmp.eq.s32.totalorder %s16, 3
    %p86 = por %p84, %p85
    %p88 = scmp.ne.s32.totalorder %s71, %s87
    %p89 = scmp.eq.s32.totalorder %s16, 0
    %p90 = por %p88, %p89
    %s91 = ssub.s32 %s10, %s17
    %p92 = scmp.eq.s32.totalorder %s91, 0
    %s94 = sadd.s32 %s93, 1
    %s95 = scalar_select %p92, %s93, %s94
    %p98 = pneg %p92
    %p99 = scmp.eq.s32.totalorder %s10, 3
    %p100 = por %p98, %p99
    %p101 = scmp.ne.s32.totalorder %s93, %s96
    %p102 = scmp.eq.s32.totalorder %s10, 0
    %p103 = por %p101, %p102
    %p104 = scmp.ne.s32.totalorder %s93, %s96
    %p105 = scmp.eq.s32.totalorder %s15, 3
    %p106 = por %p104, %p105
    %p107 = scmp.ne.s32.totalorder %s96, %s97
    %p108 = scmp.eq.s32.totalorder %s15, 0
    %p109 = por %p107, %p108
    %p110 = scmp.ne.s32.totalorder %s96, %s97
    %p111 = scmp.eq.s32.totalorder %s16, 3
    %p112 = por %p110, %p111
    %p114 = scmp.ne.s32.totalorder %s97, %s113
    %p115 = scmp.eq.s32.totalorder %s16, 0
    %p116 = por %p114, %p115
    %p117 = scmp.le.s32.totalorder 1, %s10
    %p118 = scmp.lt.s32.totalorder %s10, 5
    %p119 = pnand %p117, %p118
    %p120 = pneg %p119
    // Predicated region
    $region9: #{cnn_block.2} parent=5 // pred_check
      _
    $region10: #{cnn_block.2} parent=5 // pred_check_branch
      %122 = sbr.rel (%p119) target = $region12
    $region11: #{cnn_block.2} parent=5 // pred_region
      %s123 = ssub.s32 %s10, 1
      // Predicated region
      $region13: #{cnn_block.2} parent=11 // pred_check
        %p124 = pneg %p57
      $region14: #{cnn_block.2} parent=11 // pred_check_branch
        %126 = sbr.rel (%p124) target = $region16
      $region15: #{cnn_block.2} parent=11 // pred_region
        _
      $region16: #{cnn_block.2} parent=11 // pred_fallthru
        _
    $region12: #{cnn_block.2} parent=5 // pred_fallthru
      _
    %p127 = scmp.lt.s32.totalorder %s10, 4
    // Predicated region
    $region17: #{cnn_block.2} parent=5 // pred_check
      %p128 = pneg %p127
    $region18: #{cnn_block.2} parent=5 // pred_check_branch
      %130 = sbr.rel (%p128) target = $region20
    $region19: #{cnn_block.2} parent=5 // pred_region
      // Predicated region
      $region21: #{cnn_block.2} parent=19 // pred_check
        %p131 = pneg %p30
      $region22: #{cnn_block.2} parent=19 // pred_check_branch
        %133 = sbr.rel (%p131) target = $region24
      $region23: #{cnn_block.2} parent=19 // pred_region
        %s134 = smul.u32 16, %s10
        %p135 = scmp.lt.s32.totalorder %s134, 63
        %s136 = scalar_select %p135, %s134, 63
        %s137 = smul.addr %s136, 4
        %s138 = scalar_lea.vmem %s0, %s137
        %s139 = smul.u32 16, %s10
      $region24: #{cnn_block.2} parent=19 // pred_fallthru
        _
    $region20: #{cnn_block.2} parent=5 // pred_fallthru
      _
    %p140 = scmp.le.s32.totalorder 1, %s10
    %p141 = scmp.lt.s32.totalorder %s10, 5
    %p142 = pnand %p140, %p141
    %p143 = pneg %p142
    // Predicated region
    $region25: #{cnn_block.2} parent=5 // pred_check
      _
    $region26: #{cnn_block.2} parent=5 // pred_check_branch
      %145 = sbr.rel (%p142) target = $region28
    $region27: #{cnn_block.2} parent=5 // pred_region
      %s146 = ssub.s32 %s10, 1
      %s147 = smul.u32 16, %s15
      %p148 = scmp.lt.s32.totalorder %s147, 63
      %s149 = scalar_select %p148, %s147, 63
      %s150 = smul.addr %s149, 4
      %s151 = scalar_lea.vmem %s0, %s150
      %p152 = pneg %p36
      %p153 = pneg %p33
      %p154 = pneg %p57
      %p155 = pneg %p54
      %p156 = pneg %p83
      %p157 = pneg %p80
      %p158 = scmp.lt.s32.totalorder %s15, 3
      %s159 = scalar_select %p158, %s15, 3
      %s160 = scalar_lea.vmem %s2, %s159
      %p161 = pneg %p109
      %p162 = pneg %p106
      %p163 = scmp.lt.s32.totalorder %s15, 3
      %s164 = scalar_select %p163, %s15, 3
      %s165 = scalar_lea.vmem %s3, %s164
      %s166 = smul.u32 16, %s15
      %p167 = scmp.lt.s32.totalorder %s166, 63
      %s168 = scalar_select %p167, %s166, 63
      %s169 = smul.addr %s168, 4
      %s170 = scalar_lea.vmem %s0, %s169
      %s171 = smul.u32 16, %s15
      %p172 = scmp.lt.s32.totalorder %s15, 3
      %s173 = scalar_select %p172, %s15, 3
      %s174 = scalar_lea.vmem %s2, %s173
      %p175 = scmp.lt.s32.totalorder %s15, 3
      %s176 = scalar_select %p175, %s15, 3
      %s177 = scalar_lea.vmem %s3, %s176
      %v179 = vld [vmem:[%s170] sm:$0xf]
      %v180 = vld [vmem:[%s170 + $0x4] sm:$0xf]
      %v181 = vld [vmem:[%s170 + $0x8] sm:$0xf]
      %v182 = vld [vmem:[%s170 + $0xc] sm:$0xf]
      %v183 = vld [vmem:[%s170 + $0x10] sm:$0xf]
      %v184 = vld [vmem:[%s170 + $0x14] sm:$0xf]
      %v185 = vld [vmem:[%s170 + $0x18] sm:$0xf]
      %v186 = vld [vmem:[%s170 + $0x1c] sm:$0xf]
      %v187 = vld [vmem:[%s170 + $0x20] sm:$0xf]
      %v188 = vld [vmem:[%s170 + $0x24] sm:$0xf]
      %v189 = vld [vmem:[%s170 + $0x28] sm:$0xf]
      %v190 = vld [vmem:[%s170 + $0x2c] sm:$0xf]
      %v191 = vld [vmem:[%s170 + $0x30] sm:$0xf]
      %v192 = vld [vmem:[%s170 + $0x34] sm:$0xf]
      %v193 = vld [vmem:[%s170 + $0x38] sm:$0xf]
      %v194 = vld [vmem:[%s170 + $0x3c] sm:$0xf]
      %v195 = vld [vmem:[%s1] sm:$0xf]
      %v196 = vld [vmem:[%s1 + $0x4] sm:$0xf]
      %v197 = vld [vmem:[%s1 + $0x8] sm:$0xf]
      %v198 = vld [vmem:[%s1 + $0xc] sm:$0xf]
      %v199 = vld [vmem:[%s1 + $0x10] sm:$0x3]
      %v216 = vunpack.c.l.b16 %v179
      %v217 = vunpack.c.l.b16 %v180
      %v218 = vunpack.c.l.b16 %v181
      %v219 = vunpack.c.l.b16 %v182
      %v220 = vunpack.c.l.b16 %v183
      %v221 = vunpack.c.l.b16 %v184
      %v222 = vunpack.c.l.b16 %v185
      %v223 = vunpack.c.l.b16 %v186
      %v224 = vunpack.c.l.b16 %v187
      %v225 = vunpack.c.l.b16 %v188
      %v226 = vunpack.c.l.b16 %v189
      %v227 = vunpack.c.l.b16 %v190
      %v228 = vunpack.c.l.b16 %v191
      %v229 = vunpack.c.l.b16 %v192
      %v230 = vunpack.c.l.b16 %v193
      %v231 = vunpack.c.l.b16 %v194
      %v232 = vpack.c.b16 %v217, %v216
      %v233 = vpack.c.b16 %v219, %v218
      %v234 = vpack.c.b16 %v221, %v220
      %v235 = vpack.c.b16 %v223, %v222
      %v236 = vpack.c.b16 %v225, %v224
      %v237 = vpack.c.b16 %v227, %v226
      %v238 = vpack.c.b16 %v229, %v228
      %v239 = vpack.c.b16 %v231, %v230
      %v245 = vunpack.c.l.b16 %v195
      %v246 = vunpack.c.l.b16 %v196
      %v247 = vunpack.c.l.b16 %v197
      %v248 = vunpack.c.l.b16 %v198
      %v249 = vunpack.c.l.b16 %v199
      %v250 = vpack.c.b16 %v246, %v245
      %v251 = vpack.c.b16 %v248, %v247
      %v252 = vpack.c.b16 %v249, %v249
      %vm255 = vcmask 293888
      %v257 = vsel %vm255, %v232, 0
      %v260 = vsel %vm255, %v233, 0
      %v263 = vsel %vm255, %v234, 0
      %v266 = vsel %vm255, %v235, 0
      %v269 = vsel %vm255, %v236, 0
      %v272 = vsel %vm255, %v237, 0
      %v275 = vsel %vm255, %v238, 0
      %v278 = vsel %vm255, %v239, 0
      %vm280 = vcmask 1041408
      %v282 = vsel %vm280, %v252, 0
      %284 = vmatprep.subr.bf16.mxu0 0
      %285 = vmatpush1.bf16.msra.mxu0 %v250
      %286 = vmatprep.subr.bf16.mxu0 0
      %287 = vmatpush1.bf16.msra.mxu0 %v251
      %288 = vmatprep.subr.bf16.mxu0 0
      %289 = vmatpush1.bf16.msra.mxu0 %v282
      %290 = vmatprep.subr.bf16.mxu0 0
      %291 = vmatpush1.bf16.msra.mxu0 0
      %292 = vmatprep.subr.bf16.mxu0 0
      %293 = vmatpush1.bf16.msra.mxu0 0
      %294 = vmatprep.subr.bf16.mxu0 0
      %295 = vmatpush1.bf16.msra.mxu0 0
      %296 = vmatprep.subr.bf16.mxu0 0
      %297 = vmatpush1.bf16.msra.mxu0 0
      %298 = vmatprep.subr.bf16.mxu0 0
      %299 = vmatpush1.bf16.msra.mxu0 0
      %300 = vmatprep.subr.bf16.mxu0 0
      %301 = vmatpush1.bf16.msra.mxu0 0
      %302 = vmatprep.subr.bf16.mxu0 0
      %303 = vmatpush1.bf16.msra.mxu0 0
      %304 = vmatprep.subr.bf16.mxu0 0
      %305 = vmatpush1.bf16.msra.mxu0 0
      %306 = vmatprep.subr.bf16.mxu0 0
      %307 = vmatpush1.bf16.msra.mxu0 0
      %308 = vmatprep.subr.bf16.mxu0 0
      %309 = vmatpush1.bf16.msra.mxu0 0
      %310 = vmatprep.subr.bf16.mxu0 0
      %311 = vmatpush1.bf16.msra.mxu0 0
      %312 = vmatprep.subr.bf16.mxu0 0
      %313 = vmatpush1.bf16.msra.mxu0 0
      %314 = vmatprep.subr.bf16.mxu0 0
      %315 = vmatpush1.bf16.msra.mxu0 0
      %316 = vmatprep.mubr.bf16.mxu0 0
      %317 = vmatmul.mubr.bf16.gmra.mrb[0].mxu0 %v257
      %v318 = vpop.f32.mrb[0].mxu0
      %v319 = vadd.f32 0.0, %v318
      %v320 = vpop.f32.mrb[0].mxu0
      %v321 = vpop.f32.mrb[0].mxu0
      %v322 = vadd.f32 0.0, %v321
      %v323 = vpop.f32.mrb[0].mxu0
      %324 = vmatprep.mubr.bf16.mxu0 0
      %325 = vmatmul.mubr.bf16.gmra.mrb[0].mxu0 %v260
      %v326 = vpop.f32.mrb[0].mxu0
      %v327 = vadd.f32 0.0, %v326
      %v328 = vpop.f32.mrb[0].mxu0
      %v329 = vpop.f32.mrb[0].mxu0
      %v330 = vadd.f32 0.0, %v329
      %v331 = vpop.f32.mrb[0].mxu0
      %332 = vmatprep.mubr.bf16.mxu0 0
      %333 = vmatmul.mubr.bf16.gmra.mrb[0].mxu0 %v263
      %v334 = vpop.f32.mrb[0].mxu0
      %v335 = vadd.f32 0.0, %v334
      %v336 = vpop.f32.mrb[0].mxu0
      %v337 = vpop.f32.mrb[0].mxu0
      %v338 = vadd.f32 0.0, %v337
      %v339 = vpop.f32.mrb[0].mxu0
      %340 = vmatprep.mubr.bf16.mxu0 0
      %341 = vmatmul.mubr.bf16.gmra.mrb[0].mxu0 %v266
      %v342 = vpop.f32.mrb[0].mxu0
      %v343 = vadd.f32 0.0, %v342
      %v344 = vpop.f32.mrb[0].mxu0
      %v345 = vpop.f32.mrb[0].mxu0
      %v346 = vadd.f32 0.0, %v345
      %v347 = vpop.f32.mrb[0].mxu0
      %348 = vmatprep.mubr.bf16.mxu0 0
      %349 = vmatmul.mubr.bf16.gmra.mrb[0].mxu0 %v269
      %v350 = vpop.f32.mrb[0].mxu0
      %v351 = vadd.f32 0.0, %v350
      %v352 = vpop.f32.mrb[0].mxu0
      %v353 = vpop.f32.mrb[0].mxu0
      %v354 = vadd.f32 0.0, %v353
      %v355 = vpop.f32.mrb[0].mxu0
      %356 = vmatprep.mubr.bf16.mxu0 0
      %357 = vmatmul.mubr.bf16.gmra.mrb[0].mxu0 %v272
      %v358 = vpop.f32.mrb[0].mxu0
      %v359 = vadd.f32 0.0, %v358
      %v360 = vpop.f32.mrb[0].mxu0
      %v361 = vpop.f32.mrb[0].mxu0
      %v362 = vadd.f32 0.0, %v361
      %v363 = vpop.f32.mrb[0].mxu0
      %364 = vmatprep.mubr.bf16.mxu0 0
      %365 = vmatmul.mubr.bf16.gmra.mrb[0].mxu0 %v275
      %v366 = vpop.f32.mrb[0].mxu0
      %v367 = vadd.f32 0.0, %v366
      %v368 = vpop.f32.mrb[0].mxu0
      %v369 = vpop.f32.mrb[0].mxu0
      %v370 = vadd.f32 0.0, %v369
      %v371 = vpop.f32.mrb[0].mxu0
      %372 = vmatprep.mubr.bf16.mxu0 0
      %373 = vmatmul.mubr.bf16.gmra.mrb[0].mxu0 %v278
      %v374 = vpop.f32.mrb[0].mxu0
      %v375 = vadd.f32 0.0, %v374
      %v376 = vpop.f32.mrb[0].mxu0
      %v377 = vpop.f32.mrb[0].mxu0
      %v378 = vadd.f32 0.0, %v377
      %v379 = vpop.f32.mrb[0].mxu0
      %380 = vdwg.mxu0
      %v381 = vadd.f32 %v319, %v322
      %v382 = vadd.f32 %v381, %v327
      %v383 = vadd.f32 %v382, %v330
      %v384 = vadd.f32 %v383, %v335
      %v385 = vadd.f32 %v384, %v338
      %v386 = vadd.f32 %v385, %v343
      %v387 = vadd.f32 %v386, %v346
      %v388 = vadd.f32 %v387, %v351
      %v389 = vadd.f32 %v388, %v354
      %v390 = vadd.f32 %v389, %v359
      %v391 = vadd.f32 %v390, %v362
      %v392 = vadd.f32 %v391, %v367
      %v393 = vadd.f32 %v392, %v370
      %v394 = vadd.f32 %v393, %v375
      %v395 = vadd.f32 %v394, %v378
      %v396 = vrot.slane %v395, 4
      %v397 = vadd.f32 %v395, %v396
      %v398 = vrot.slane %v397, 2
      %v399 = vadd.f32 %v397, %v398
      %v400 = vrot.slane %v399, 1
      %v401 = vadd.f32 %v399, %v400
      %402 = vst [vmem:[%s174] sm:$0x1] %v401
      %v403 = vmul.f32 %v319, %v319
      %v404 = vmul.f32 %v322, %v322
      %v405 = vmul.f32 %v327, %v327
      %v406 = vmul.f32 %v330, %v330
      %v407 = vmul.f32 %v335, %v335
      %v408 = vmul.f32 %v338, %v338
      %v409 = vmul.f32 %v343, %v343
      %v410 = vmul.f32 %v346, %v346
      %v411 = vmul.f32 %v351, %v351
      %v412 = vmul.f32 %v354, %v354
      %v413 = vmul.f32 %v359, %v359
      %v414 = vmul.f32 %v362, %v362
      %v415 = vmul.f32 %v367, %v367
      %v416 = vmul.f32 %v370, %v370
      %v417 = vmul.f32 %v375, %v375
      %v418 = vmul.f32 %v378, %v378
      %v419 = vadd.f32 %v403, %v404
      %v420 = vadd.f32 %v419, %v405
      %v421 = vadd.f32 %v420, %v406
      %v422 = vadd.f32 %v421, %v407
      %v423 = vadd.f32 %v422, %v408
      %v424 = vadd.f32 %v423, %v409
      %v425 = vadd.f32 %v424, %v410
      %v426 = vadd.f32 %v425, %v411
      %v427 = vadd.f32 %v426, %v412
      %v428 = vadd.f32 %v427, %v413
      %v429 = vadd.f32 %v428, %v414
      %v430 = vadd.f32 %v429, %v415
      %v431 = vadd.f32 %v430, %v416
      %v432 = vadd.f32 %v431, %v417
      %v433 = vadd.f32 %v432, %v418
      %v434 = vrot.slane %v433, 4
      %v435 = vadd.f32 %v433, %v434
      %v436 = vrot.slane %v435, 2
      %v437 = vadd.f32 %v435, %v436
      %v438 = vrot.slane %v437, 1
      %v439 = vadd.f32 %v437, %v438
      %440 = vst [vmem:[%s177] sm:$0x1] %v439
      %p441 = scmp.lt.s32.totalorder %s15, 3
      %s442 = scalar_select %p441, %s15, 3
      %s443 = scalar_lea.vmem %s2, %s442
      %p444 = scmp.lt.s32.totalorder %s15, 3
      %s445 = scalar_select %p444, %s15, 3
      %s446 = scalar_lea.vmem %s3, %s445
      // Predicated region
      $region29: #{cnn_block.2} parent=27 // pred_check
        %p447 = pneg %p80
      $region30: #{cnn_block.2} parent=27 // pred_check_branch
        %449 = sbr.rel (%p447) target = $region32
      $region31: #{cnn_block.2} parent=27 // pred_region
        _
      $region32: #{cnn_block.2} parent=27 // pred_fallthru
        _
      // Predicated region
      $region33: #{cnn_block.2} parent=27 // pred_check
        %p450 = pneg %p106
      $region34: #{cnn_block.2} parent=27 // pred_check_branch
        %452 = sbr.rel (%p450) target = $region36
      $region35: #{cnn_block.2} parent=27 // pred_region
        _
      $region36: #{cnn_block.2} parent=27 // pred_fallthru
        _
    $region28: #{cnn_block.2} parent=5 // pred_fallthru
      _
    %p453 = scmp.le.s32.totalorder 2, %s10
    // Predicated region
    $region37: #{cnn_block.2} parent=5 // pred_check
      %p454 = pneg %p453
    $region38: #{cnn_block.2} parent=5 // pred_check_branch
      %456 = sbr.rel (%p454) target = $region40
    $region39: #{cnn_block.2} parent=5 // pred_region
      %s457 = ssub.s32 %s10, 2
      // Predicated region
      $region41: #{cnn_block.2} parent=39 // pred_check
        %p458 = pneg %p86
      $region42: #{cnn_block.2} parent=39 // pred_check_branch
        %460 = sbr.rel (%p458) target = $region44
      $region43: #{cnn_block.2} parent=39 // pred_region
        %p461 = scmp.lt.s32.totalorder %s16, 3
        %s462 = scalar_select %p461, %s16, 3
        %s463 = scalar_lea.vmem %s2, %s462
      $region44: #{cnn_block.2} parent=39 // pred_fallthru
        _
      // Predicated region
      $region45: #{cnn_block.2} parent=39 // pred_check
        %p464 = pneg %p112
      $region46: #{cnn_block.2} parent=39 // pred_check_branch
        %466 = sbr.rel (%p464) target = $region48
      $region47: #{cnn_block.2} parent=39 // pred_region
        %p467 = scmp.lt.s32.totalorder %s16, 3
        %s468 = scalar_select %p467, %s16, 3
        %s469 = scalar_lea.vmem %s3, %s468
      $region48: #{cnn_block.2} parent=39 // pred_fallthru
        _
    $region40: #{cnn_block.2} parent=5 // pred_fallthru
      _
  $region6: #{cnn_block.2} parent=0 // loop_footer
    %s14 = sadd.s32 1, %s10
  $region7: #{cnn_block.2} parent=0 // loop_footer_branch
    %9 = sbr.rel target = $region3
  $region8: #{cnn_block.2} parent=0 // loop_exit
    _

// kernel: cnn_block.3
$region0: #{cnn_block.3}
  #allocation0 [shape = 'u32[]', space=smem, size = 0x4, offset = 0x4, fixed_abs, tag = 'smem constant byte address 0x4 - core index']
  #allocation1 [shape = 'u32[144,128]{1,0:T(1,128)}', space=vmem, size = 0x12000, scoped, tag = 'internal scratch']
  %s0 = inlined_call_operand.vmem [shape: bf16[512,36], index: 0, kind: input, shape index: {}]
  %s1 = inlined_call_operand.vmem [shape: bf16[36,128], index: 1, kind: input, shape index: {}]
  %s2 = inlined_call_operand.vmem [shape: f32[1,128], index: 2, kind: input, shape index: {}]
  %s3 = inlined_call_operand.vmem [shape: f32[1,128], index: 3, kind: input, shape index: {}]
  %s4 = inlined_call_operand.vmem [shape: f32[512,8], index: 4, kind: output, shape index: {}]
  %s5 = sld [smem:[#allocation0]]
  $region49: #{cnn_block.3} parent=0
    _
  %s7 = ssub.s32 1, %s5
  %s8 = scalar_select 0, %s7, %s5
  loop: start=0, step=1, limit=6
  $region2: #{cnn_block.3} parent=0 // loop_pre_header
    _
  $region3: #{cnn_block.3} parent=0 // loop_header
    %s10 = sphi 0, %s14
    %p11 = scmp.ge.s32.totalorder %s10, 6
    %s20 = sphi 0, %s22
    %s23 = sphi 0, %s20
    %s24 = sphi 0, %s23
    %s40 = sphi 0, %s24
    %s44 = sphi 0, %s44
    %s46 = sphi 0, %s44
    %s47 = sphi 0, %s46
    %s61 = sphi 0, %s47
    %s65 = sphi 0, %s65
    %s67 = sphi 0, %s65
    %s68 = sphi 0, %s67
    %s82 = sphi 0, %s68
    %s86 = sphi 0, %s86
    %s88 = sphi 0, %s86
    %s89 = sphi 0, %s88
    %s103 = sphi 0, %s89
    %s109 = sphi 0, %s111
    %s112 = sphi 0, %s109
    %s113 = sphi 0, %s112
    %s129 = sphi 0, %s113
  $region4: #{cnn_block.3} parent=0 // loop_header_branch
    %13 = sbr.rel (%p11) target = $region8
  $region5: #{cnn_block.3} parent=0 // loop_body
    %s15 = ssub.s32 %s10, 1
    %s16 = ssub.s32 %s10, 2
    %s17 = sadd.s32 %s10, 1
    %s18 = ssub.s32 %s10, %s17
    %p19 = scmp.eq.s32.totalorder %s18, 0
    %s21 = sadd.s32 %s20, 1
    %s22 = scalar_select %p19, %s20, %s21
    %p25 = pneg %p19
    %p26 = scmp.eq.s32.totalorder %s10, 3
    %p27 = por %p25, %p26
    %p28 = scmp.ne.s32.totalorder %s20, %s23
    %p29 = scmp.eq.s32.totalorder %s10, 0
    %p30 = por %p28, %p29
    %p31 = scmp.ne.s32.totalorder %s20, %s23
    %p32 = scmp.eq.s32.totalorder %s15, 3
    %p33 = por %p31, %p32
    %p34 = scmp.ne.s32.totalorder %s23, %s24
    %p35 = scmp.eq.s32.totalorder %s15, 0
    %p36 = por %p34, %p35
    %p37 = scmp.ne.s32.totalorder %s23, %s24
    %p38 = scmp.eq.s32.totalorder %s16, 3
    %p39 = por %p37, %p38
    %p41 = scmp.ne.s32.totalorder %s24, %s40
    %p42 = scmp.eq.s32.totalorder %s16, 0
    %p43 = por %p41, %p42
    %s45 = sadd.s32 %s44, 1
    %p48 = scmp.eq.s32.totalorder %s10, 3
    %p49 = scmp.ne.s32.totalorder %s44, %s46
    %p50 = scmp.eq.s32.totalorder %s10, 0
    %p51 = por %p49, %p50
    %p52 = scmp.ne.s32.totalorder %s44, %s46
    %p53 = scmp.eq.s32.totalorder %s15, 3
    %p54 = por %p52, %p53
    %p55 = scmp.ne.s32.totalorder %s46, %s47
    %p56 = scmp.eq.s32.totalorder %s15, 0
    %p57 = por %p55, %p56
    %p58 = scmp.ne.s32.totalorder %s46, %s47
    %p59 = scmp.eq.s32.totalorder %s16, 3
    %p60 = por %p58, %p59
    %p62 = scmp.ne.s32.totalorder %s47, %s61
    %p63 = scmp.eq.s32.totalorder %s16, 0
    %p64 = por %p62, %p63
    %s66 = sadd.s32 %s65, 1
    %p69 = scmp.eq.s32.totalorder %s10, 3
    %p70 = scmp.ne.s32.totalorder %s65, %s67
    %p71 = scmp.eq.s32.totalorder %s10, 0
    %p72 = por %p70, %p71
    %p73 = scmp.ne.s32.totalorder %s65, %s67
    %p74 = scmp.eq.s32.totalorder %s15, 3
    %p75 = por %p73, %p74
    %p76 = scmp.ne.s32.totalorder %s67, %s68
    %p77 = scmp.eq.s32.totalorder %s15, 0
    %p78 = por %p76, %p77
    %p79 = scmp.ne.s32.totalorder %s67, %s68
    %p80 = scmp.eq.s32.totalorder %s16, 3
    %p81 = por %p79, %p80
    %p83 = scmp.ne.s32.totalorder %s68, %s82
    %p84 = scmp.eq.s32.totalorder %s16, 0
    %p85 = por %p83, %p84
    %s87 = sadd.s32 %s86, 1
    %p90 = scmp.eq.s32.totalorder %s10, 3
    %p91 = scmp.ne.s32.totalorder %s86, %s88
    %p92 = scmp.eq.s32.totalorder %s10, 0
    %p93 = por %p91, %p92
    %p94 = scmp.ne.s32.totalorder %s86, %s88
    %p95 = scmp.eq.s32.totalorder %s15, 3
    %p96 = por %p94, %p95
    %p97 = scmp.ne.s32.totalorder %s88, %s89
    %p98 = scmp.eq.s32.totalorder %s15, 0
    %p99 = por %p97, %p98
    %p100 = scmp.ne.s32.totalorder %s88, %s89
    %p101 = scmp.eq.s32.totalorder %s16, 3
    %p102 = por %p100, %p101
    %p104 = scmp.ne.s32.totalorder %s89, %s103
    %p105 = scmp.eq.s32.totalorder %s16, 0
    %p106 = por %p104, %p105
    %s107 = ssub.s32 %s10, %s17
    %p108 = scmp.eq.s32.totalorder %s107, 0
    %s110 = sadd.s32 %s109, 1
    %s111 = scalar_select %p108, %s109, %s110
    %p114 = pneg %p108
    %p115 = scmp.eq.s32.totalorder %s10, 3
    %p116 = por %p114, %p115
    %p117 = scmp.ne.s32.totalorder %s109, %s112
    %p118 = scmp.eq.s32.totalorder %s10, 0
    %p119 = por %p117, %p118
    %p120 = scmp.ne.s32.totalorder %s109, %s112
    %p121 = scmp.eq.s32.totalorder %s15, 3
    %p122 = por %p120, %p121
    %p123 = scmp.ne.s32.totalorder %s112, %s113
    %p124 = scmp.eq.s32.totalorder %s15, 0
    %p125 = por %p123, %p124
    %p126 = scmp.ne.s32.totalorder %s112, %s113
    %p127 = scmp.eq.s32.totalorder %s16, 3
    %p128 = por %p126, %p127
    %p130 = scmp.ne.s32.totalorder %s113, %s129
    %p131 = scmp.eq.s32.totalorder %s16, 0
    %p132 = por %p130, %p131
    %p133 = scmp.le.s32.totalorder 1, %s10
    %p134 = scmp.lt.s32.totalorder %s10, 5
    %p135 = pnand %p133, %p134
    %p136 = pneg %p135
    // Predicated region
    $region9: #{cnn_block.3} parent=5 // pred_check
      _
    $region10: #{cnn_block.3} parent=5 // pred_check_branch
      %138 = sbr.rel (%p135) target = $region12
    $region11: #{cnn_block.3} parent=5 // pred_region
      %s139 = ssub.s32 %s10, 1
      // Predicated region
      $region13: #{cnn_block.3} parent=11 // pred_check
        %p140 = pneg %p57
      $region14: #{cnn_block.3} parent=11 // pred_check_branch
        %142 = sbr.rel (%p140) target = $region16
      $region15: #{cnn_block.3} parent=11 // pred_region
        _
      $region16: #{cnn_block.3} parent=11 // pred_fallthru
        _
      // Predicated region
      $region17: #{cnn_block.3} parent=11 // pred_check
        %p143 = pneg %p78
      $region18: #{cnn_block.3} parent=11 // pred_check_branch
        %145 = sbr.rel (%p143) target = $region20
      $region19: #{cnn_block.3} parent=11 // pred_region
        _
      $region20: #{cnn_block.3} parent=11 // pred_fallthru
        _
      // Predicated region
      $region21: #{cnn_block.3} parent=11 // pred_check
        %p146 = pneg %p99
      $region22: #{cnn_block.3} parent=11 // pred_check_branch
        %148 = sbr.rel (%p146) target = $region24
      $region23: #{cnn_block.3} parent=11 // pred_region
        _
      $region24: #{cnn_block.3} parent=11 // pred_fallthru
        _
    $region12: #{cnn_block.3} parent=5 // pred_fallthru
      _
    %p149 = scmp.lt.s32.totalorder %s10, 4
    // Predicated region
    $region25: #{cnn_block.3} parent=5 // pred_check
      %p150 = pneg %p149
    $region26: #{cnn_block.3} parent=5 // pred_check_branch
      %152 = sbr.rel (%p150) target = $region28
    $region27: #{cnn_block.3} parent=5 // pred_region
      // Predicated region
      $region29: #{cnn_block.3} parent=27 // pred_check
        %p153 = pneg %p30
      $region30: #{cnn_block.3} parent=27 // pred_check_branch
        %155 = sbr.rel (%p153) target = $region32
      $region31: #{cnn_block.3} parent=27 // pred_region
        %s156 = smul.u32 16, %s10
        %p157 = scmp.lt.s32.totalorder %s156, 63
        %s158 = scalar_select %p157, %s156, 63
        %s159 = smul.addr %s158, 4
        %s160 = scalar_lea.vmem %s0, %s159
        %s161 = smul.u32 16, %s10
      $region32: #{cnn_block.3} parent=27 // pred_fallthru
        _
    $region28: #{cnn_block.3} parent=5 // pred_fallthru
      _
    %p162 = scmp.le.s32.totalorder 1, %s10
    %p163 = scmp.lt.s32.totalorder %s10, 5
    %p164 = pnand %p162, %p163
    %p165 = pneg %p164
    // Predicated region
    $region33: #{cnn_block.3} parent=5 // pred_check
      _
    $region34: #{cnn_block.3} parent=5 // pred_check_branch
      %167 = sbr.rel (%p164) target = $region36
    $region35: #{cnn_block.3} parent=5 // pred_region
      %s168 = ssub.s32 %s10, 1
      %s169 = smul.u32 16, %s15
      %p170 = scmp.lt.s32.totalorder %s169, 63
      %s171 = scalar_select %p170, %s169, 63
      %s172 = smul.addr %s171, 4
      %s173 = scalar_lea.vmem %s0, %s172
      %p174 = pneg %p36
      %p175 = pneg %p33
      %p176 = pneg %p57
      %p177 = pneg %p54
      %p178 = pneg %p78
      %p179 = pneg %p75
      %p180 = pneg %p99
      %p181 = pneg %p96
      %p182 = pneg %p125
      %p183 = pneg %p122
      %s184 = smul.u32 16, %s15
      %p185 = scmp.lt.s32.totalorder %s184, 63
      %s186 = scalar_select %p185, %s184, 63
      %s187 = smul.addr %s186, 8
      %s188 = scalar_lea.vmem %s4, %s187
      %s189 = smul.u32 16, %s15
      %p190 = scmp.lt.s32.totalorder %s189, 63
      %s191 = scalar_select %p190, %s189, 63
      %s192 = smul.addr %s191, 4
      %s193 = scalar_lea.vmem %s0, %s192
      %s194 = smul.u32 16, %s15
      %s195 = smul.u32 16, %s15
      %p196 = scmp.lt.s32.totalorder %s195, 63
      %s197 = scalar_select %p196, %s195, 63
      %s198 = smul.addr %s197, 8
      %s199 = scalar_lea.vmem %s4, %s198
      %s200 = smul.u32 16, %s15
      %v202 = vld [vmem:[%s193] sm:$0xf]
      %v203 = vld [vmem:[%s193 + $0x4] sm:$0xf]
      %v204 = vld [vmem:[%s193 + $0x8] sm:$0xf]
      %v205 = vld [vmem:[%s193 + $0xc] sm:$0xf]
      %v206 = vld [vmem:[%s193 + $0x10] sm:$0xf]
      %v207 = vld [vmem:[%s193 + $0x14] sm:$0xf]
      %v208 = vld [vmem:[%s193 + $0x18] sm:$0xf]
      %v209 = vld [vmem:[%s193 + $0x1c] sm:$0xf]
      %v210 = vld [vmem:[%s193 + $0x20] sm:$0xf]
      %v211 = vld [vmem:[%s193 + $0x24] sm:$0xf]
      %v212 = vld [vmem:[%s193 + $0x28] sm:$0xf]
      %v213 = vld [vmem:[%s193 + $0x2c] sm:$0xf]
      %v214 = vld [vmem:[%s193 + $0x30] sm:$0xf]
      %v215 = vld [vmem:[%s193 + $0x34] sm:$0xf]
      %v216 = vld [vmem:[%s193 + $0x38] sm:$0xf]
      %v217 = vld [vmem:[%s193 + $0x3c] sm:$0xf]
      %v218 = vld [vmem:[%s1] sm:$0xf]
      %v219 = vld [vmem:[%s1 + $0x4] sm:$0xf]
      %v220 = vld [vmem:[%s1 + $0x8] sm:$0xf]
      %v221 = vld [vmem:[%s1 + $0xc] sm:$0xf]
      %v222 = vld [vmem:[%s1 + $0x10] sm:$0x3]
      %v239 = vunpack.c.l.b16 %v202
      %v240 = vunpack.c.l.b16 %v203
      %v241 = vunpack.c.l.b16 %v204
      %v242 = vunpack.c.l.b16 %v205
      %v243 = vunpack.c.l.b16 %v206
      %v244 = vunpack.c.l.b16 %v207
      %v245 = vunpack.c.l.b16 %v208
      %v246 = vunpack.c.l.b16 %v209
      %v247 = vunpack.c.l.b16 %v210
      %v248 = vunpack.c.l.b16 %v211
      %v249 = vunpack.c.l.b16 %v212
      %v250 = vunpack.c.l.b16 %v213
      %v251 = vunpack.c.l.b16 %v214
      %v252 = vunpack.c.l.b16 %v215
      %v253 = vunpack.c.l.b16 %v216
      %v254 = vunpack.c.l.b16 %v217
      %v255 = vpack.c.b16 %v240, %v239
      %v256 = vpack.c.b16 %v242, %v241
      %v257 = vpack.c.b16 %v244, %v243
      %v258 = vpack.c.b16 %v246, %v245
      %v259 = vpack.c.b16 %v248, %v247
      %v260 = vpack.c.b16 %v250, %v249
      %v261 = vpack.c.b16 %v252, %v251
      %v262 = vpack.c.b16 %v254, %v253
      %v268 = vunpack.c.l.b16 %v218
      %v269 = vunpack.c.l.b16 %v219
      %v270 = vunpack.c.l.b16 %v220
      %v271 = vunpack.c.l.b16 %v221
      %v272 = vunpack.c.l.b16 %v222
      %v273 = vpack.c.b16 %v269, %v268
      %v274 = vpack.c.b16 %v271, %v270
      %v275 = vpack.c.b16 %v272, %v272
      %vm278 = vcmask 293888
      %v280 = vsel %vm278, %v255, 0
      %v283 = vsel %vm278, %v256, 0
      %v286 = vsel %vm278, %v257, 0
      %v289 = vsel %vm278, %v258, 0
      %v292 = vsel %vm278, %v259, 0
      %v295 = vsel %vm278, %v260, 0
      %v298 = vsel %vm278, %v261, 0
      %v301 = vsel %vm278, %v262, 0
      %vm303 = vcmask 1041408
      %v305 = vsel %vm303, %v275, 0
      %307 = vmatprep.subr.bf16.mxu0 0
      %308 = vmatpush1.bf16.msra.mxu0 %v273
      %309 = vmatprep.subr.bf16.mxu0 0
      %310 = vmatpush1.bf16.msra.mxu0 %v274
      %311 = vmatprep.subr.bf16.mxu0 0
      %312 = vmatpush1.bf16.msra.mxu0 %v305
      %313 = vmatprep.subr.bf16.mxu0 0
      %314 = vmatpush1.bf16.msra.mxu0 0
      %315 = vmatprep.subr.bf16.mxu0 0
      %316 = vmatpush1.bf16.msra.mxu0 0
      %317 = vmatprep.subr.bf16.mxu0 0
      %318 = vmatpush1.bf16.msra.mxu0 0
      %319 = vmatprep.subr.bf16.mxu0 0
      %320 = vmatpush1.bf16.msra.mxu0 0
      %321 = vmatprep.subr.bf16.mxu0 0
      %322 = vmatpush1.bf16.msra.mxu0 0
      %323 = vmatprep.subr.bf16.mxu0 0
      %324 = vmatpush1.bf16.msra.mxu0 0
      %325 = vmatprep.subr.bf16.mxu0 0
      %326 = vmatpush1.bf16.msra.mxu0 0
      %327 = vmatprep.subr.bf16.mxu0 0
      %328 = vmatpush1.bf16.msra.mxu0 0
      %329 = vmatprep.subr.bf16.mxu0 0
      %330 = vmatpush1.bf16.msra.mxu0 0
      %331 = vmatprep.subr.bf16.mxu0 0
      %332 = vmatpush1.bf16.msra.mxu0 0
      %333 = vmatprep.subr.bf16.mxu0 0
      %334 = vmatpush1.bf16.msra.mxu0 0
      %335 = vmatprep.subr.bf16.mxu0 0
      %336 = vmatpush1.bf16.msra.mxu0 0
      %337 = vmatprep.subr.bf16.mxu0 0
      %338 = vmatpush1.bf16.msra.mxu0 0
      %339 = vmatprep.mubr.bf16.mxu0 0
      %340 = vmatmul.mubr.bf16.gmra.mrb[0].mxu0 %v280
      %v341 = vpop.f32.mrb[0].mxu0
      %v342 = vadd.f32 0.0, %v341
      %v343 = vpop.f32.mrb[0].mxu0
      %v344 = vpop.f32.mrb[0].mxu0
      %v345 = vadd.f32 0.0, %v344
      %v346 = vpop.f32.mrb[0].mxu0
      %347 = vmatprep.mubr.bf16.mxu0 0
      %348 = vmatmul.mubr.bf16.gmra.mrb[0].mxu0 %v283
      %v349 = vpop.f32.mrb[0].mxu0
      %v350 = vadd.f32 0.0, %v349
      %v351 = vpop.f32.mrb[0].mxu0
      %v352 = vpop.f32.mrb[0].mxu0
      %v353 = vadd.f32 0.0, %v352
      %v354 = vpop.f32.mrb[0].mxu0
      %355 = vmatprep.mubr.bf16.mxu0 0
      %356 = vmatmul.mubr.bf16.gmra.mrb[0].mxu0 %v286
      %v357 = vpop.f32.mrb[0].mxu0
      %v358 = vadd.f32 0.0, %v357
      %v359 = vpop.f32.mrb[0].mxu0
      %v360 = vpop.f32.mrb[0].mxu0
      %v361 = vadd.f32 0.0, %v360
      %v362 = vpop.f32.mrb[0].mxu0
      %363 = vmatprep.mubr.bf16.mxu0 0
      %364 = vmatmul.mubr.bf16.gmra.mrb[0].mxu0 %v289
      %v365 = vpop.f32.mrb[0].mxu0
      %v366 = vadd.f32 0.0, %v365
      %v367 = vpop.f32.mrb[0].mxu0
      %v368 = vpop.f32.mrb[0].mxu0
      %v369 = vadd.f32 0.0, %v368
      %v370 = vpop.f32.mrb[0].mxu0
      %371 = vmatprep.mubr.bf16.mxu0 0
      %372 = vmatmul.mubr.bf16.gmra.mrb[0].mxu0 %v292
      %v373 = vpop.f32.mrb[0].mxu0
      %v374 = vadd.f32 0.0, %v373
      %v375 = vpop.f32.mrb[0].mxu0
      %v376 = vpop.f32.mrb[0].mxu0
      %v377 = vadd.f32 0.0, %v376
      %v378 = vpop.f32.mrb[0].mxu0
      %379 = vmatprep.mubr.bf16.mxu0 0
      %380 = vmatmul.mubr.bf16.gmra.mrb[0].mxu0 %v295
      %v381 = vpop.f32.mrb[0].mxu0
      %v382 = vadd.f32 0.0, %v381
      %v383 = vpop.f32.mrb[0].mxu0
      %v384 = vpop.f32.mrb[0].mxu0
      %v385 = vadd.f32 0.0, %v384
      %v386 = vpop.f32.mrb[0].mxu0
      %387 = vmatprep.mubr.bf16.mxu0 0
      %388 = vmatmul.mubr.bf16.gmra.mrb[0].mxu0 %v298
      %v389 = vpop.f32.mrb[0].mxu0
      %v390 = vadd.f32 0.0, %v389
      %v391 = vpop.f32.mrb[0].mxu0
      %v392 = vpop.f32.mrb[0].mxu0
      %v393 = vadd.f32 0.0, %v392
      %v394 = vpop.f32.mrb[0].mxu0
      %395 = vmatprep.mubr.bf16.mxu0 0
      %396 = vmatmul.mubr.bf16.gmra.mrb[0].mxu0 %v301
      %v397 = vpop.f32.mrb[0].mxu0
      %v398 = vadd.f32 0.0, %v397
      %v399 = vpop.f32.mrb[0].mxu0
      %v400 = vpop.f32.mrb[0].mxu0
      %v401 = vadd.f32 0.0, %v400
      %v402 = vpop.f32.mrb[0].mxu0
      %403 = vdwg.mxu0
      %v404 = vld [vmem:[%s2] sm:$0x1]
      %v406 = vlaneseq
      %v407 = vshrl.u32 %v406, 7
      %v408 = vsub.s32 0, %v407
      %v409 = vrot.slane %v404, %v408
      %v411 = vmul.f32 %v342, %v409
      %v412 = vmul.f32 %v345, %v409
      %v413 = vmul.f32 %v350, %v409
      %v414 = vmul.f32 %v353, %v409
      %v415 = vmul.f32 %v358, %v409
      %v416 = vmul.f32 %v361, %v409
      %v417 = vmul.f32 %v366, %v409
      %v418 = vmul.f32 %v369, %v409
      %v419 = vmul.f32 %v374, %v409
      %v420 = vmul.f32 %v377, %v409
      %v421 = vmul.f32 %v382, %v409
      %v422 = vmul.f32 %v385, %v409
      %v423 = vmul.f32 %v390, %v409
      %v424 = vmul.f32 %v393, %v409
      %v425 = vmul.f32 %v398, %v409
      %v426 = vmul.f32 %v401, %v409
      %v427 = vld [vmem:[%s3] sm:$0x1]
      %v429 = vlaneseq
      %v430 = vshrl.u32 %v429, 7
      %v431 = vsub.s32 0, %v430
      %v432 = vrot.slane %v427, %v431
      %v434 = vadd.f32 %v411, %v432
      %v435 = vadd.f32 %v412, %v432
      %v436 = vadd.f32 %v413, %v432
      %v437 = vadd.f32 %v414, %v432
      %v438 = vadd.f32 %v415, %v432
      %v439 = vadd.f32 %v416, %v432
      %v440 = vadd.f32 %v417, %v432
      %v441 = vadd.f32 %v418, %v432
      %v442 = vadd.f32 %v419, %v432
      %v443 = vadd.f32 %v420, %v432
      %v444 = vadd.f32 %v421, %v432
      %v445 = vadd.f32 %v422, %v432
      %v446 = vadd.f32 %v423, %v432
      %v447 = vadd.f32 %v424, %v432
      %v448 = vadd.f32 %v425, %v432
      %v449 = vadd.f32 %v426, %v432
      %vm450 = vcmp.gt.f32.partialorder %v434, 0.0
      %vm451 = vcmp.gt.f32.partialorder %v435, 0.0
      %vm452 = vcmp.gt.f32.partialorder %v436, 0.0
      %vm453 = vcmp.gt.f32.partialorder %v437, 0.0
      %vm454 = vcmp.gt.f32.partialorder %v438, 0.0
      %vm455 = vcmp.gt.f32.partialorder %v439, 0.0
      %vm456 = vcmp.gt.f32.partialorder %v440, 0.0
      %vm457 = vcmp.gt.f32.partialorder %v441, 0.0
      %vm458 = vcmp.gt.f32.partialorder %v442, 0.0
      %vm459 = vcmp.gt.f32.partialorder %v443, 0.0
      %vm460 = vcmp.gt.f32.partialorder %v444, 0.0
      %vm461 = vcmp.gt.f32.partialorder %v445, 0.0
      %vm462 = vcmp.gt.f32.partialorder %v446, 0.0
      %vm463 = vcmp.gt.f32.partialorder %v447, 0.0
      %vm464 = vcmp.gt.f32.partialorder %v448, 0.0
      %vm465 = vcmp.gt.f32.partialorder %v449, 0.0
      %v466 = vmul.f32 %v434, 0.1
      %v467 = vmul.f32 %v435, 0.1
      %v468 = vmul.f32 %v436, 0.1
      %v469 = vmul.f32 %v437, 0.1
      %v470 = vmul.f32 %v438, 0.1
      %v471 = vmul.f32 %v439, 0.1
      %v472 = vmul.f32 %v440, 0.1
      %v473 = vmul.f32 %v441, 0.1
      %v474 = vmul.f32 %v442, 0.1
      %v475 = vmul.f32 %v443, 0.1
      %v476 = vmul.f32 %v444, 0.1
      %v477 = vmul.f32 %v445, 0.1
      %v478 = vmul.f32 %v446, 0.1
      %v479 = vmul.f32 %v447, 0.1
      %v480 = vmul.f32 %v448, 0.1
      %v481 = vmul.f32 %v449, 0.1
      %v482 = vsel %vm450, %v434, %v466
      %v483 = vsel %vm451, %v435, %v467
      %v484 = vsel %vm452, %v436, %v468
      %v485 = vsel %vm453, %v437, %v469
      %v486 = vsel %vm454, %v438, %v470
      %v487 = vsel %vm455, %v439, %v471
      %v488 = vsel %vm456, %v440, %v472
      %v489 = vsel %vm457, %v441, %v473
      %v490 = vsel %vm458, %v442, %v474
      %v491 = vsel %vm459, %v443, %v475
      %v492 = vsel %vm460, %v444, %v476
      %v493 = vsel %vm461, %v445, %v477
      %v494 = vsel %vm462, %v446, %v478
      %v495 = vsel %vm463, %v447, %v479
      %v496 = vsel %vm464, %v448, %v480
      %v497 = vsel %vm465, %v449, %v481
      %vm498 = vcmask 64512
      %499 = vst.msk [vmem:[%s199] sm:$0xff] %vm498, %v482
      %500 = vst.msk [vmem:[%s199 + $0x8] sm:$0xff] %vm498, %v483
      %501 = vst.msk [vmem:[%s199 + $0x10] sm:$0xff] %vm498, %v484
      %502 = vst.msk [vmem:[%s199 + $0x18] sm:$0xff] %vm498, %v485
      %503 = vst.msk [vmem:[%s199 + $0x20] sm:$0xff] %vm498, %v486
      %504 = vst.msk [vmem:[%s199 + $0x28] sm:$0xff] %vm498, %v487
      %505 = vst.msk [vmem:[%s199 + $0x30] sm:$0xff] %vm498, %v488
      %506 = vst.msk [vmem:[%s199 + $0x38] sm:$0xff] %vm498, %v489
      %507 = vst.msk [vmem:[%s199 + $0x40] sm:$0xff] %vm498, %v490
      %508 = vst.msk [vmem:[%s199 + $0x48] sm:$0xff] %vm498, %v491
      %509 = vst.msk [vmem:[%s199 + $0x50] sm:$0xff] %vm498, %v492
      %510 = vst.msk [vmem:[%s199 + $0x58] sm:$0xff] %vm498, %v493
      %511 = vst.msk [vmem:[%s199 + $0x60] sm:$0xff] %vm498, %v494
      %512 = vst.msk [vmem:[%s199 + $0x68] sm:$0xff] %vm498, %v495
      %513 = vst.msk [vmem:[%s199 + $0x70] sm:$0xff] %vm498, %v496
      %514 = vst.msk [vmem:[%s199 + $0x78] sm:$0xff] %vm498, %v497
      %s515 = smul.u32 16, %s15
      %p516 = scmp.lt.s32.totalorder %s515, 63
      %s517 = scalar_select %p516, %s515, 63
      %s518 = smul.addr %s517, 8
      %s519 = scalar_lea.vmem %s4, %s518
      // Predicated region
      $region37: #{cnn_block.3} parent=35 // pred_check
        %p520 = pneg %p122
      $region38: #{cnn_block.3} parent=35 // pred_check_branch
        %522 = sbr.rel (%p520) target = $region40
      $region39: #{cnn_block.3} parent=35 // pred_region
        %s523 = smul.u32 16, %s15
      $region40: #{cnn_block.3} parent=35 // pred_fallthru
        _
    $region36: #{cnn_block.3} parent=5 // pred_fallthru
      _
    %p524 = scmp.le.s32.totalorder 2, %s10
    // Predicated region
    $region41: #{cnn_block.3} parent=5 // pred_check
      %p525 = pneg %p524
    $region42: #{cnn_block.3} parent=5 // pred_check_branch
      %527 = sbr.rel (%p525) target = $region44
    $region43: #{cnn_block.3} parent=5 // pred_region
      %s528 = ssub.s32 %s10, 2
      // Predicated region
      $region45: #{cnn_block.3} parent=43 // pred_check
        %p529 = pneg %p128
      $region46: #{cnn_block.3} parent=43 // pred_check_branch
        %531 = sbr.rel (%p529) target = $region48
      $region47: #{cnn_block.3} parent=43 // pred_region
        %s532 = smul.u32 16, %s16
        %p533 = scmp.lt.s32.totalorder %s532, 63
        %s534 = scalar_select %p533, %s532, 63
        %s535 = smul.addr %s534, 8
        %s536 = scalar_lea.vmem %s4, %s535
      $region48: #{cnn_block.3} parent=43 // pred_fallthru
        _
    $region44: #{cnn_block.3} parent=5 // pred_fallthru
      _
  $region6: #{cnn_block.3} parent=0 // loop_footer
    %s14 = sadd.s32 1, %s10
  $region7: #{cnn_block.3} parent=0 // loop_footer_branch
    %9 = sbr.rel target = $region3
  $region8: #{cnn_block.3} parent=0 // loop_exit
    _

</llo_original>
